<compile_context>
chip_gen: v6e
topology: v6e:2x2x1
jax: 0.10.0
libtpu: 0.0.40
codegen_flags: <defaults>
</compile_context>

<pallas_src>
import functools
import math

import jax
import jax.numpy as jnp
from jax.experimental import pallas as pl
from jax.experimental.pallas import tpu as pltpu


def _agcn_kernel(x_ref, sup_ref, wid_ref, wrest_ref, bias_ref, o_ref, acc_ref,
                 *, num_supports, cheb_k, compute_dtype):
    """One batch tile.

    x_ref    : (N, Bt*Cin)                      graph layout: x[n, b*Cin + c]
    sup_ref  : (S, N, N)                        stacked supports (grid-invariant)
    wid_ref  : (Bt*Cin, Bt*Cout)                merged identity-term block-diag weights
    wrest_ref: (S*(cheb_k-1), Bt*Cin, Bt*Cout)  per-term block-diag weights
    bias_ref : (1, Bt*Cout)                     bias tiled per batch element
    o_ref    : (N, Bt*Cout)                     lane-dense graph-layout output slab
    acc_ref  : (N, Bt*Cout) f32                 VMEM accumulator scratch
    """
    f32 = jnp.float32
    x32 = x_ref[...].astype(f32)               # recursion state kept in f32
    xc = x32.astype(compute_dtype)

    # Identity terms of all supports merged: T0 @ X == X  -> one wide GEMM.
    acc_ref[...] = jnp.dot(xc, wid_ref[...].astype(compute_dtype),
                           preferred_element_type=f32)

    for s in range(num_supports):
        a = sup_ref[s].astype(compute_dtype)   # (N, N)

        # T1 @ X = A @ X : batch folded into lanes -> one wide graph GEMM.
        y1 = jnp.dot(a, xc, preferred_element_type=f32)          # (N, Bt*Cin) f32
        acc_ref[...] += jnp.dot(
            y1.astype(compute_dtype),
            wrest_ref[s * (cheb_k - 1)].astype(compute_dtype),
            preferred_element_type=f32)

        if cheb_k > 2:
            a2 = a + a                          # pre-scaled 2*A, once per support
            y_prev2, y_prev1 = x32, y1
            for k in range(2, cheb_k):
                # T_k @ X = 2*A @ (T_{k-1} @ X) - T_{k-2} @ X  (recursion on Y,
                # the NxN T_k matrices are never materialized).
                yk = jnp.dot(a2, y_prev1.astype(compute_dtype),
                             preferred_element_type=f32) - y_prev2
                acc_ref[...] += jnp.dot(
                    yk.astype(compute_dtype),
                    wrest_ref[s * (cheb_k - 1) + (k - 1)].astype(compute_dtype),
                    preferred_element_type=f32)
                y_prev2, y_prev1 = y_prev1, yk

    o_ref[...] = (acc_ref[...] + bias_ref[...].astype(f32)).astype(o_ref.dtype)


def _block_diag_expand(w, bt):
    """w: (T, Cin, Cout) -> (T, bt*Cin, bt*Cout), per-batch block-diagonal."""
    t, cin, cout = w.shape
    eye = jnp.eye(bt, dtype=w.dtype)
    wexp = jnp.einsum("ab,tio->taibo", eye, w)
    return wexp.reshape(t, bt * cin, bt * cout)


def agcn_forward(x, supports, weights, bias, cheb_k, *,
                 batch_tile=None, compute_dtype=jnp.float32):
    """x: [B, N, Cin]; supports: [S, N, N]; weights: [S*cheb_k*Cin, Cout]; bias: [Cout]."""
    B, N, Cin = x.shape
    S = supports.shape[0]
    Cout = weights.shape[1]
    assert cheb_k >= 2, "AGCN always emits at least [I, A] per support"
    assert weights.shape[0] == S * cheb_k * Cin
    assert supports.shape == (S, N, N)

    # ---- choose batch tile: prefer >=2 lane-aligned grid steps ------------------
    if batch_tile is None:
        bt = None
        for cand in range(1, B + 1):
            if (cand * Cin) % 128 == 0 and (cand * Cout) % 128 == 0:
                bt = cand
                break
        batch_tile = bt if (bt is not None and 2 * bt <= B) else B
    num_tiles = pl.cdiv(B, batch_tile)
    B_pad = num_tiles * batch_tile
    assert num_tiles == 1 or ((batch_tile * Cin) % 128 == 0
                              and (batch_tile * Cout) % 128 == 0), (
        "batch_tile*Cin and batch_tile*Cout must be 128-aligned when tiling")

    # ---- pad node dim for sublane / MXU alignment (zeros are exact) -------------
    n_align = 128 if N >= 128 else 8
    N_pad = ((N + n_align - 1) // n_align) * n_align

    if B_pad != B or N_pad != N:
        x = jnp.pad(x, ((0, B_pad - B), (0, N_pad - N), (0, 0)))
    if N_pad != N:
        supports = jnp.pad(supports, ((0, 0), (0, N_pad - N), (0, N_pad - N)))

    # ---- graph layout: fold batch into lanes so the graph matmul is A @ X[N, Bt*Cin]
    x_graph = jnp.transpose(x, (1, 0, 2)).reshape(N_pad, B_pad * Cin)

    # ---- block-diagonal per-term weights (built once, outside the kernel) -------
    w4 = weights.reshape(S, cheb_k, Cin, Cout)
    w_id = _block_diag_expand(w4[:, 0].sum(axis=0)[None], batch_tile)[0]
    w_rest = _block_diag_expand(
        w4[:, 1:].reshape(S * (cheb_k - 1), Cin, Cout), batch_tile)
    bias_g = jnp.tile(bias, (batch_tile,)).reshape(1, batch_tile * Cout)

    kernel = functools.partial(
        _agcn_kernel, num_supports=S, cheb_k=cheb_k, compute_dtype=compute_dtype)

    t_rest = S * (cheb_k - 1)
    itemsize = 4
    flops = (2 * S * (cheb_k - 1) * N_pad * N_pad * B_pad * Cin        # graph GEMMs
             + 2 * (t_rest + 1) * N_pad * (batch_tile * Cin)
             * (batch_tile * Cout) * num_tiles)                        # projection
    bytes_accessed = itemsize * (
        N_pad * B_pad * Cin + S * N_pad * N_pad
        + (t_rest + 1) * (batch_tile * Cin) * (batch_tile * Cout)
        + batch_tile * Cout + N_pad * B_pad * Cout)

    # Explicit VMEM budget: double-buffered operands + f32 accumulator + slack.
    vmem_bytes = itemsize * (
        2 * N_pad * batch_tile * Cin                                   # x tile
        + 2 * S * N_pad * N_pad                                        # supports
        + 2 * (t_rest + 1) * (batch_tile * Cin) * (batch_tile * Cout)  # weights
        + 2 * batch_tile * Cout                                        # bias
        + 2 * N_pad * batch_tile * Cout                                # out tile
        + N_pad * batch_tile * Cout)                                   # accumulator
    vmem_limit = int(min(128 * 1024 * 1024, max(vmem_bytes + (4 << 20), 16 << 20)))

    out_g = pl.pallas_call(
        kernel,
        out_shape=jax.ShapeDtypeStruct((N_pad, B_pad * Cout), x.dtype),
        grid_spec=pltpu.PrefetchScalarGridSpec(
            num_scalar_prefetch=0,
            grid=(num_tiles,),
            in_specs=[
                pl.BlockSpec((N_pad, batch_tile * Cin), lambda t: (0, t)),
                pl.BlockSpec((S, N_pad, N_pad), lambda t: (0, 0, 0)),
                pl.BlockSpec((batch_tile * Cin, batch_tile * Cout),
                             lambda t: (0, 0)),
                pl.BlockSpec((t_rest, batch_tile * Cin, batch_tile * Cout),
                             lambda t: (0, 0, 0)),
                pl.BlockSpec((1, batch_tile * Cout), lambda t: (0, 0)),
            ],
            out_specs=pl.BlockSpec((N_pad, batch_tile * Cout), lambda t: (0, t)),
            scratch_shapes=[pltpu.VMEM((N_pad, batch_tile * Cout), jnp.float32)],
        ),
        compiler_params=pltpu.CompilerParams(
            dimension_semantics=("parallel",),
            vmem_limit_bytes=vmem_limit),
        cost_estimate=pl.CostEstimate(
            flops=flops, transcendentals=0, bytes_accessed=bytes_accessed),
    )(x_graph, supports, w_id, w_rest, bias_g)

    # Un-permute the lane-dense graph-layout slab back to [B, N, Cout].
    out = jnp.transpose(out_g.reshape(N_pad, B_pad, Cout), (1, 0, 2))
    return out[:B, :N]


def agcn_reference(x, supports, weights, bias, cheb_k):
    """Pure-JAX reference mirroring the PyTorch forward exactly."""
    N = supports.shape[1]
    support_set = []
    for s in range(supports.shape[0]):
        sup = supports[s]
        ks = [jnp.eye(N, dtype=x.dtype), sup]
        for _ in range(2, cheb_k):
            ks.append(2.0 * (sup @ ks[-1]) - ks[-2])
        support_set.extend(ks)
    x_g = jnp.concatenate(
        [jnp.einsum("nm,bmc->bnc", t, x) for t in support_set], axis=-1)
    return jnp.einsum("bni,io->bno", x_g, weights) + bias


if __name__ == "__main__":
    # Small, AGCN-consistent shapes.
    B, N = 2, 16          # batch, number of graph nodes
    dim_in, dim_out = 4, 32
    cheb_k = 3
    num_supports = 2      # module's "2 *" in the weight shape implies 2 supports

    key = jax.random.PRNGKey(0)
    k_x, k_sup, k_w = jax.random.split(key, 3)

    x = jax.random.normal(k_x, (B, N, dim_in), dtype=jnp.float32)

    # Deterministic supports: row-softmaxed random matrices (adjacency-like).
    raw = jax.random.normal(k_sup, (num_supports, N, N), dtype=jnp.float32)
    supports = jax.nn.softmax(raw, axis=-1)

    # xavier_normal_ init for weights [2*cheb_k*dim_in, dim_out]; bias = 0.
    fan_in = num_supports * cheb_k * dim_in
    fan_out = dim_out
    std = math.sqrt(2.0 / (fan_in + fan_out))
    weights = std * jax.random.normal(k_w, (fan_in, fan_out), dtype=jnp.float32)
    bias = jnp.zeros((dim_out,), dtype=jnp.float32)

    out = agcn_forward(x, supports, weights, bias, cheb_k)
    out = jax.block_until_ready(out)

    ref = agcn_reference(x, supports, weights, bias, cheb_k)
    assert out.shape == (B, N, dim_out)
    assert jnp.allclose(out, ref, rtol=1e-4, atol=1e-4), "mismatch vs reference"

    print("KERNEL_OK")
</pallas_src>

<mosaic_0001>
module attributes {stable_mosaic.version = 11 : i64} {
  func.func @_agcn_kernel(%arg0: i32, %arg1: memref<16x8xf32, #tpu.memory_space<vmem>>, %arg2: memref<2x16x16xf32, #tpu.memory_space<vmem>>, %arg3: memref<8x64xf32, #tpu.memory_space<vmem>>, %arg4: memref<4x8x64xf32, #tpu.memory_space<vmem>>, %arg5: memref<1x64xf32, #tpu.memory_space<vmem>>, %arg6: memref<16x64xf32, #tpu.memory_space<vmem>>, %arg7: memref<16x64xf32, #tpu.memory_space<vmem>>) attributes {dimension_semantics = [#tpu.dimension_semantics<parallel>], iteration_bounds = array<i64: 1>, scalar_prefetch = 0 : i64, scratch_operands = 1 : i64, tpu.core_type = #tpu.core_type<tc>, window_params = [{transform_indices = @transform_0, window_bounds = array<i64: 16, 8>}, {pipeline_mode = #tpu.pipeline_mode<synchronous>, transform_indices = @transform_1, window_bounds = array<i64: 2, 16, 16>}, {pipeline_mode = #tpu.pipeline_mode<synchronous>, transform_indices = @transform_2, window_bounds = array<i64: 8, 64>}, {pipeline_mode = #tpu.pipeline_mode<synchronous>, transform_indices = @transform_3, window_bounds = array<i64: 4, 8, 64>}, {pipeline_mode = #tpu.pipeline_mode<synchronous>, transform_indices = @transform_4, window_bounds = array<i64: 1, 64>}, {transform_indices = @transform_5, window_bounds = array<i64: 16, 64>}]} {
    %c0 = arith.constant 0 : index
    %c0_0 = arith.constant 0 : index
    %0 = vector.load %arg1[%c0, %c0_0] : memref<16x8xf32, #tpu.memory_space<vmem>>, vector<16x8xf32>
    %c0_1 = arith.constant 0 : index
    %c0_2 = arith.constant 0 : index
    %1 = vector.load %arg3[%c0_1, %c0_2] : memref<8x64xf32, #tpu.memory_space<vmem>>, vector<8x64xf32>
    %cst = arith.constant dense<0.000000e+00> : vector<16x64xf32>
    %2 = tpu.matmul %0, %1, %cst {dimension_numbers = #tpu.dot_dimension_numbers<[1], [0], [0], [1], [0, 0, 1, 1], [], []>} : vector<16x8xf32>, vector<8x64xf32>, vector<16x64xf32> -> vector<16x64xf32>
    %c0_3 = arith.constant 0 : index
    %c0_4 = arith.constant 0 : index
    %3 = vector.load %arg7[%c0_3, %c0_4] : memref<16x64xf32, #tpu.memory_space<vmem>>, vector<16x64xf32>
    tpu.vector_store %arg7[%c0_3, %c0_4], %2 {strides = array<i32>} : memref<16x64xf32, #tpu.memory_space<vmem>>, vector<16x64xf32>,
    %c0_5 = arith.constant 0 : index
    %c0_6 = arith.constant 0 : index
    %c0_7 = arith.constant 0 : index
    %4 = vector.load %arg2[%c0_5, %c0_6, %c0_7] : memref<2x16x16xf32, #tpu.memory_space<vmem>>, vector<1x16x16xf32>
    %5 = vector.shape_cast %4 : vector<1x16x16xf32> to vector<16x16xf32>
    %cst_8 = arith.constant dense<0.000000e+00> : vector<16x8xf32>
    %6 = tpu.matmul %5, %0, %cst_8 {dimension_numbers = #tpu.dot_dimension_numbers<[1], [0], [0], [1], [0, 0, 1, 1], [], []>} : vector<16x16xf32>, vector<16x8xf32>, vector<16x8xf32> -> vector<16x8xf32>
    %c0_9 = arith.constant 0 : index
    %c0_10 = arith.constant 0 : index
    %7 = vector.load %arg7[%c0_9, %c0_10] : memref<16x64xf32, #tpu.memory_space<vmem>>, vector<16x64xf32>
    %c0_11 = arith.constant 0 : index
    %c0_12 = arith.constant 0 : index
    %c0_13 = arith.constant 0 : index
    %8 = vector.load %arg4[%c0_11, %c0_12, %c0_13] : memref<4x8x64xf32, #tpu.memory_space<vmem>>, vector<1x8x64xf32>
    %9 = vector.shape_cast %8 : vector<1x8x64xf32> to vector<8x64xf32>
    %cst_14 = arith.constant dense<0.000000e+00> : vector<16x64xf32>
    %10 = tpu.matmul %6, %9, %cst_14 {dimension_numbers = #tpu.dot_dimension_numbers<[1], [0], [0], [1], [0, 0, 1, 1], [], []>} : vector<16x8xf32>, vector<8x64xf32>, vector<16x64xf32> -> vector<16x64xf32>
    %11 = arith.addf %7, %10 : vector<16x64xf32>
    %c0_15 = arith.constant 0 : index
    %c0_16 = arith.constant 0 : index
    %12 = vector.load %arg7[%c0_15, %c0_16] : memref<16x64xf32, #tpu.memory_space<vmem>>, vector<16x64xf32>
    tpu.vector_store %arg7[%c0_15, %c0_16], %11 {strides = array<i32>} : memref<16x64xf32, #tpu.memory_space<vmem>>, vector<16x64xf32>,
    %13 = arith.addf %5, %5 : vector<16x16xf32>
    %cst_17 = arith.constant dense<0.000000e+00> : vector<16x8xf32>
    %14 = tpu.matmul %13, %6, %cst_17 {dimension_numbers = #tpu.dot_dimension_numbers<[1], [0], [0], [1], [0, 0, 1, 1], [], []>} : vector<16x16xf32>, vector<16x8xf32>, vector<16x8xf32> -> vector<16x8xf32>
    %15 = arith.subf %14, %0 : vector<16x8xf32>
    %c0_18 = arith.constant 0 : index
    %c0_19 = arith.constant 0 : index
    %16 = vector.load %arg7[%c0_18, %c0_19] : memref<16x64xf32, #tpu.memory_space<vmem>>, vector<16x64xf32>
    %c1 = arith.constant 1 : index
    %c0_20 = arith.constant 0 : index
    %c0_21 = arith.constant 0 : index
    %17 = vector.load %arg4[%c1, %c0_20, %c0_21] : memref<4x8x64xf32, #tpu.memory_space<vmem>>, vector<1x8x64xf32>
    %18 = vector.shape_cast %17 : vector<1x8x64xf32> to vector<8x64xf32>
    %cst_22 = arith.constant dense<0.000000e+00> : vector<16x64xf32>
    %19 = tpu.matmul %15, %18, %cst_22 {dimension_numbers = #tpu.dot_dimension_numbers<[1], [0], [0], [1], [0, 0, 1, 1], [], []>} : vector<16x8xf32>, vector<8x64xf32>, vector<16x64xf32> -> vector<16x64xf32>
    %20 = arith.addf %16, %19 : vector<16x64xf32>
    %c0_23 = arith.constant 0 : index
    %c0_24 = arith.constant 0 : index
    %21 = vector.load %arg7[%c0_23, %c0_24] : memref<16x64xf32, #tpu.memory_space<vmem>>, vector<16x64xf32>
    tpu.vector_store %arg7[%c0_23, %c0_24], %20 {strides = array<i32>} : memref<16x64xf32, #tpu.memory_space<vmem>>, vector<16x64xf32>,
    %c1_25 = arith.constant 1 : index
    %c0_26 = arith.constant 0 : index
    %c0_27 = arith.constant 0 : index
    %22 = vector.load %arg2[%c1_25, %c0_26, %c0_27] : memref<2x16x16xf32, #tpu.memory_space<vmem>>, vector<1x16x16xf32>
    %23 = vector.shape_cast %22 : vector<1x16x16xf32> to vector<16x16xf32>
    %cst_28 = arith.constant dense<0.000000e+00> : vector<16x8xf32>
    %24 = tpu.matmul %23, %0, %cst_28 {dimension_numbers = #tpu.dot_dimension_numbers<[1], [0], [0], [1], [0, 0, 1, 1], [], []>} : vector<16x16xf32>, vector<16x8xf32>, vector<16x8xf32> -> vector<16x8xf32>
    %c0_29 = arith.constant 0 : index
    %c0_30 = arith.constant 0 : index
    %25 = vector.load %arg7[%c0_29, %c0_30] : memref<16x64xf32, #tpu.memory_space<vmem>>, vector<16x64xf32>
    %c2 = arith.constant 2 : index
    %c0_31 = arith.constant 0 : index
    %c0_32 = arith.constant 0 : index
    %26 = vector.load %arg4[%c2, %c0_31, %c0_32] : memref<4x8x64xf32, #tpu.memory_space<vmem>>, vector<1x8x64xf32>
    %27 = vector.shape_cast %26 : vector<1x8x64xf32> to vector<8x64xf32>
    %cst_33 = arith.constant dense<0.000000e+00> : vector<16x64xf32>
    %28 = tpu.matmul %24, %27, %cst_33 {dimension_numbers = #tpu.dot_dimension_numbers<[1], [0], [0], [1], [0, 0, 1, 1], [], []>} : vector<16x8xf32>, vector<8x64xf32>, vector<16x64xf32> -> vector<16x64xf32>
    %29 = arith.addf %25, %28 : vector<16x64xf32>
    %c0_34 = arith.constant 0 : index
    %c0_35 = arith.constant 0 : index
    %30 = vector.load %arg7[%c0_34, %c0_35] : memref<16x64xf32, #tpu.memory_space<vmem>>, vector<16x64xf32>
    tpu.vector_store %arg7[%c0_34, %c0_35], %29 {strides = array<i32>} : memref<16x64xf32, #tpu.memory_space<vmem>>, vector<16x64xf32>,
    %31 = arith.addf %23, %23 : vector<16x16xf32>
    %cst_36 = arith.constant dense<0.000000e+00> : vector<16x8xf32>
    %32 = tpu.matmul %31, %24, %cst_36 {dimension_numbers = #tpu.dot_dimension_numbers<[1], [0], [0], [1], [0, 0, 1, 1], [], []>} : vector<16x16xf32>, vector<16x8xf32>, vector<16x8xf32> -> vector<16x8xf32>
    %33 = arith.subf %32, %0 : vector<16x8xf32>
    %c0_37 = arith.constant 0 : index
    %c0_38 = arith.constant 0 : index
    %34 = vector.load %arg7[%c0_37, %c0_38] : memref<16x64xf32, #tpu.memory_space<vmem>>, vector<16x64xf32>
    %c3 = arith.constant 3 : index
    %c0_39 = arith.constant 0 : index
    %c0_40 = arith.constant 0 : index
    %35 = vector.load %arg4[%c3, %c0_39, %c0_40] : memref<4x8x64xf32, #tpu.memory_space<vmem>>, vector<1x8x64xf32>
    %36 = vector.shape_cast %35 : vector<1x8x64xf32> to vector<8x64xf32>
    %cst_41 = arith.constant dense<0.000000e+00> : vector<16x64xf32>
    %37 = tpu.matmul %33, %36, %cst_41 {dimension_numbers = #tpu.dot_dimension_numbers<[1], [0], [0], [1], [0, 0, 1, 1], [], []>} : vector<16x8xf32>, vector<8x64xf32>, vector<16x64xf32> -> vector<16x64xf32>
    %38 = arith.addf %34, %37 : vector<16x64xf32>
    %c0_42 = arith.constant 0 : index
    %c0_43 = arith.constant 0 : index
    %39 = vector.load %arg7[%c0_42, %c0_43] : memref<16x64xf32, #tpu.memory_space<vmem>>, vector<16x64xf32>
    tpu.vector_store %arg7[%c0_42, %c0_43], %38 {strides = array<i32>} : memref<16x64xf32, #tpu.memory_space<vmem>>, vector<16x64xf32>,
    %c0_44 = arith.constant 0 : index
    %c0_45 = arith.constant 0 : index
    %40 = vector.load %arg7[%c0_44, %c0_45] : memref<16x64xf32, #tpu.memory_space<vmem>>, vector<16x64xf32>
    %c0_46 = arith.constant 0 : index
    %c0_47 = arith.constant 0 : index
    %41 = vector.load %arg5[%c0_46, %c0_47] : memref<1x64xf32, #tpu.memory_space<vmem>>, vector<1x64xf32>
    %42 = vector.broadcast %41 : vector<1x64xf32> to vector<16x64xf32>
    %43 = arith.addf %40, %42 : vector<16x64xf32>
    %c0_48 = arith.constant 0 : index
    %c0_49 = arith.constant 0 : index
    %44 = vector.load %arg6[%c0_48, %c0_49] : memref<16x64xf32, #tpu.memory_space<vmem>>, vector<16x64xf32>
    tpu.vector_store %arg6[%c0_48, %c0_49], %43 {strides = array<i32>} : memref<16x64xf32, #tpu.memory_space<vmem>>, vector<16x64xf32>,
    return
  }
  func.func @transform_0(%arg0: i32) -> (i32, i32) {
    %c0_i32 = arith.constant 0 : i32
    %c0_i32_0 = arith.constant 0 : i32
    return %c0_i32, %arg0 : i32, i32
  }
  func.func @transform_1(%arg0: i32) -> (i32, i32, i32) {
    %c0_i32 = arith.constant 0 : i32
    %c0_i32_0 = arith.constant 0 : i32
    %c0_i32_1 = arith.constant 0 : i32
    %c0_i32_2 = arith.constant 0 : i32
    return %c0_i32, %c0_i32_0, %c0_i32_1 : i32, i32, i32
  }
  func.func @transform_2(%arg0: i32) -> (i32, i32) {
    %c0_i32 = arith.constant 0 : i32
    %c0_i32_0 = arith.constant 0 : i32
    %c0_i32_1 = arith.constant 0 : i32
    return %c0_i32, %c0_i32_0 : i32, i32
  }
  func.func @transform_3(%arg0: i32) -> (i32, i32, i32) {
    %c0_i32 = arith.constant 0 : i32
    %c0_i32_0 = arith.constant 0 : i32
    %c0_i32_1 = arith.constant 0 : i32
    %c0_i32_2 = arith.constant 0 : i32
    return %c0_i32, %c0_i32_0, %c0_i32_1 : i32, i32, i32
  }
  func.func @transform_4(%arg0: i32) -> (i32, i32) {
    %c0_i32 = arith.constant 0 : i32
    %c0_i32_0 = arith.constant 0 : i32
    %c0_i32_1 = arith.constant 0 : i32
    return %c0_i32, %c0_i32_0 : i32, i32
  }
  func.func @transform_5(%arg0: i32) -> (i32, i32) {
    %c0_i32 = arith.constant 0 : i32
    %c0_i32_0 = arith.constant 0 : i32
    return %c0_i32, %arg0 : i32, i32
  }
}

</mosaic_0001>

<llo_original>
// kernel: tpu_custom_call.1
$region0: #{tpu_custom_call.1}
  #allocation0 [shape = 'u32[]', space=smem, size = 0x4, offset = 0x4, fixed_abs, tag = 'smem constant byte address 0x4 - core index']
  #allocation1 [shape = 'u32[144,128]{1,0:T(1,128)}', space=vmem, size = 0x12000, scoped, tag = 'internal scratch']
  #allocation2 [shape = 'f32[16,64]{1,0:T(8,128)}', space=vmem, size = 0x2000, scoped, tag = 'scratch operand']
  %s0 = inlined_call_operand.vmem [shape: f32[16,8], index: 0, kind: input, shape index: {}]
  %s1 = inlined_call_operand.hbm [shape: f32[2,16,16], index: 1, kind: input, shape index: {}]
  %s2 = inlined_call_operand.vmem [shape: f32[8,64], index: 2, kind: input, shape index: {}]
  %s3 = inlined_call_operand.hbm [shape: f32[4,8,64], index: 3, kind: input, shape index: {}]
  %s4 = inlined_call_operand.vmem [shape: f32[1,64], index: 4, kind: input, shape index: {}]
  %s5 = inlined_call_operand.hbm [shape: f32[16,64], index: 5, kind: output, shape index: {}]
  %s6 = sld [smem:[#allocation0]]
  $region38: #{tpu_custom_call.1} parent=0
    _
  %s8 = ssub.s32 1, %s6
  %s9 = scalar_select 0, %s8, %s6
  $region1: #{tpu_custom_call.1} parent=0
    #allocation3 [shape = 'u8[16384]{0}', space=vmem, size = 0x4000, scoped, tag = 'input window, operand 1, single buffered']
    #allocation4 [shape = 's32[1]{0}', space=sflag, size = 0x4, scoped, tag = 'scoped memory for tpu_custom_call.1']
    #allocation5 [shape = 's32[1]{0}', space=sflag, size = 0x4, scoped, tag = 'scoped memory for tpu_custom_call.1']
    #allocation6 [shape = 'u8[16384]{0}', space=vmem, size = 0x4000, scoped, tag = 'input window, operand 3, single buffered']
    #allocation7 [shape = 's32[1]{0}', space=sflag, size = 0x4, scoped, tag = 'scoped memory for tpu_custom_call.1']
    #allocation8 [shape = 'u8[8192]{0}', space=vmem, size = 0x2000, scoped, tag = 'output window, operand 0, single buffered']
    %10 = vsyncpa [#allocation4], 0
    %11 = vsyncpa [#allocation7], 0
    %12 = vsyncpa [#allocation5], 0
    // Predicated region
    $region2: #{tpu_custom_call.1} parent=1 // pred_check
      _
    $region3: #{tpu_custom_call.1} parent=1 // pred_check_branch
      %14 = sbr.rel (0) target = $region5
    $region4: #{tpu_custom_call.1} parent=1 // pred_region
      _
    $region5: #{tpu_custom_call.1} parent=1 // pred_fallthru
      _
    // Predicated region
    $region6: #{tpu_custom_call.1} parent=1 // pred_check
      _
    $region7: #{tpu_custom_call.1} parent=1 // pred_check_branch
      %16 = sbr.rel (0) target = $region9
    $region8: #{tpu_custom_call.1} parent=1 // pred_region
      %s18 = ssub.s32 512, 512
      %19 = vsyncadd [#allocation4], %s18
      %s20 = sshll.u32 [#allocation3], 4
      %s21 = int_to_ptr.vmem [resolvable:$true] %s20
      %26 = dma.hbm_to_vmem [thread:$0]  %s1, 512, %s21, [#allocation4], 128, 128, 8
    $region9: #{tpu_custom_call.1} parent=1 // pred_fallthru
      _
    // Predicated region
    $region10: #{tpu_custom_call.1} parent=1 // pred_check
      _
    $region11: #{tpu_custom_call.1} parent=1 // pred_check_branch
      %28 = sbr.rel (0) target = $region13
    $region12: #{tpu_custom_call.1} parent=1 // pred_region
      _
    $region13: #{tpu_custom_call.1} parent=1 // pred_fallthru
      _
    // Predicated region
    $region14: #{tpu_custom_call.1} parent=1 // pred_check
      _
    $region15: #{tpu_custom_call.1} parent=1 // pred_check_branch
      %30 = sbr.rel (0) target = $region17
    $region16: #{tpu_custom_call.1} parent=1 // pred_region
      %s32 = ssub.s32 512, 512
      %33 = vsyncadd [#allocation7], %s32
      %s34 = sshll.u32 [#allocation6], 4
      %s35 = int_to_ptr.vmem [resolvable:$true] %s34
      %40 = dma.hbm_to_vmem [thread:$0]  %s3, 512, %s35, [#allocation7], 128, 128, 8
    $region17: #{tpu_custom_call.1} parent=1 // pred_fallthru
      _
    // Predicated region
    $region18: #{tpu_custom_call.1} parent=1 // pred_check
      _
    $region19: #{tpu_custom_call.1} parent=1 // pred_check_branch
      %42 = sbr.rel (0) target = $region21
    $region20: #{tpu_custom_call.1} parent=1 // pred_region
      _
    $region21: #{tpu_custom_call.1} parent=1 // pred_fallthru
      _
    // Predicated region
    $region22: #{tpu_custom_call.1} parent=1 // pred_check
      _
    $region23: #{tpu_custom_call.1} parent=1 // pred_check_branch
      %44 = sbr.rel (0) target = $region25
    $region24: #{tpu_custom_call.1} parent=1 // pred_region
      %45 = dma.done [#allocation4], 512
    $region25: #{tpu_custom_call.1} parent=1 // pred_fallthru
      _
    // Predicated region
    $region26: #{tpu_custom_call.1} parent=1 // pred_check
      _
    $region27: #{tpu_custom_call.1} parent=1 // pred_check_branch
      %47 = sbr.rel (0) target = $region29
    $region28: #{tpu_custom_call.1} parent=1 // pred_region
      %48 = dma.done [#allocation7], 512
    $region29: #{tpu_custom_call.1} parent=1 // pred_fallthru
      _
    %v49 = vld [vmem:[%s0] sm:$0xff]
    %v50 = vld [vmem:[%s0 + $0x8] sm:$0xff]
    %v51 = vld [vmem:[%s2] sm:$0xff]
    %vm52 = vcmask 64512
    %v54 = vsel %vm52, %v49, 0
    %v57 = vsel %vm52, %v50, 0
    %59 = vmatprep.subr.mxu0 0.0
    %60 = vmatpush1.msra.mxu0 0.0
    %61 = vmatprep.subr.mxu0 0.0
    %62 = vmatpush1.msra.mxu0 0.0
    %63 = vmatprep.subr.mxu0 0.0
    %64 = vmatpush1.msra.mxu0 0.0
    %65 = vmatprep.subr.mxu0 0.0
    %66 = vmatpush1.msra.mxu0 0.0
    %67 = vmatprep.subr.mxu0 0.0
    %68 = vmatpush1.msra.mxu0 0.0
    %69 = vmatprep.subr.mxu0 0.0
    %70 = vmatpush1.msra.mxu0 0.0
    %71 = vmatprep.subr.mxu0 0.0
    %72 = vmatpush1.msra.mxu0 0.0
    %73 = vmatprep.subr.mxu0 0.0
    %74 = vmatpush1.msra.mxu0 0.0
    %75 = vmatprep.subr.mxu0 0.0
    %76 = vmatpush1.msra.mxu0 0.0
    %77 = vmatprep.subr.mxu0 0.0
    %78 = vmatpush1.msra.mxu0 0.0
    %79 = vmatprep.subr.mxu0 0.0
    %80 = vmatpush1.msra.mxu0 0.0
    %81 = vmatprep.subr.mxu0 0.0
    %82 = vmatpush1.msra.mxu0 0.0
    %83 = vmatprep.subr.mxu0 0.0
    %84 = vmatpush1.msra.mxu0 0.0
    %85 = vmatprep.subr.mxu0 0.0
    %86 = vmatpush1.msra.mxu0 0.0
    %87 = vmatprep.subr.mxu0 0.0
    %88 = vmatpush1.msra.mxu0 0.0
    %89 = vmatprep.subr.mxu0 0.0
    %90 = vmatpush1.msra.mxu0 %v51
    %91 = vmatprep.subr.mxu0 0.0
    %92 = vmatpush2.msra.mxu0 0.0
    %93 = vmatprep.subr.mxu0 0.0
    %94 = vmatpush2.msra.mxu0 0.0
    %95 = vmatprep.subr.mxu0 0.0
    %96 = vmatpush2.msra.mxu0 0.0
    %97 = vmatprep.subr.mxu0 0.0
    %98 = vmatpush2.msra.mxu0 0.0
    %99 = vmatprep.subr.mxu0 0.0
    %100 = vmatpush2.msra.mxu0 0.0
    %101 = vmatprep.subr.mxu0 0.0
    %102 = vmatpush2.msra.mxu0 0.0
    %103 = vmatprep.subr.mxu0 0.0
    %104 = vmatpush2.msra.mxu0 0.0
    %105 = vmatprep.subr.mxu0 0.0
    %106 = vmatpush2.msra.mxu0 0.0
    %107 = vmatprep.subr.mxu0 0.0
    %108 = vmatpush2.msra.mxu0 0.0
    %109 = vmatprep.subr.mxu0 0.0
    %110 = vmatpush2.msra.mxu0 0.0
    %111 = vmatprep.subr.mxu0 0.0
    %112 = vmatpush2.msra.mxu0 0.0
    %113 = vmatprep.subr.mxu0 0.0
    %114 = vmatpush2.msra.mxu0 0.0
    %115 = vmatprep.subr.mxu0 0.0
    %116 = vmatpush2.msra.mxu0 0.0
    %117 = vmatprep.subr.mxu0 0.0
    %118 = vmatpush2.msra.mxu0 0.0
    %119 = vmatprep.subr.mxu0 0.0
    %120 = vmatpush2.msra.mxu0 0.0
    %121 = vmatprep.subr.mxu0 0.0
    %122 = vmatpush2.msra.mxu0 0.0
    %123 = vmatprep.mubr.f32.mxu0 0.0
    %124 = vmatmul.mubr.f32.gmra.mxu0 %v54
    %v125 = vpop.f32.mrf.mxu0
    %v126 = vadd.f32 0.0, %v125
    %v127 = vpop.f32.mrf.mxu0
    %128 = vmatprep.mubr.f32.mxu0 0.0
    %129 = vmatmul.mubr.f32.gmra.mxu0 %v57
    %v130 = vpop.f32.mrf.mxu0
    %v131 = vadd.f32 0.0, %v130
    %v132 = vpop.f32.mrf.mxu0
    %133 = vdwg.mxu0
    %vm134 = vcmask 523264
    %135 = vst.msk [vmem:[#allocation2] sm:$0xff] %vm134, %v126
    %136 = vst.msk [vmem:[#allocation2 + $0x8] sm:$0xff] %vm134, %v131
    %v137 = vld [vmem:[#allocation3] sm:$0xff]
    %v138 = vld [vmem:[#allocation3 + $0x8] sm:$0xff]
    %vm139 = vcmask 130048
    %v141 = vsel %vm139, %v137, 0
    %v144 = vsel %vm139, %v138, 0
    %146 = vmatprep.subr.mxu0 0.0
    %147 = vmatpush1.msra.mxu0 0.0
    %148 = vmatprep.subr.mxu0 0.0
    %149 = vmatpush1.msra.mxu0 0.0
    %150 = vmatprep.subr.mxu0 0.0
    %151 = vmatpush1.msra.mxu0 0.0
    %152 = vmatprep.subr.mxu0 0.0
    %153 = vmatpush1.msra.mxu0 0.0
    %154 = vmatprep.subr.mxu0 0.0
    %155 = vmatpush1.msra.mxu0 0.0
    %156 = vmatprep.subr.mxu0 0.0
    %157 = vmatpush1.msra.mxu0 0.0
    %158 = vmatprep.subr.mxu0 0.0
    %159 = vmatpush1.msra.mxu0 0.0
    %160 = vmatprep.subr.mxu0 0.0
    %161 = vmatpush1.msra.mxu0 0.0
    %162 = vmatprep.subr.mxu0 0.0
    %163 = vmatpush1.msra.mxu0 0.0
    %164 = vmatprep.subr.mxu0 0.0
    %165 = vmatpush1.msra.mxu0 0.0
    %166 = vmatprep.subr.mxu0 0.0
    %167 = vmatpush1.msra.mxu0 0.0
    %168 = vmatprep.subr.mxu0 0.0
    %169 = vmatpush1.msra.mxu0 0.0
    %170 = vmatprep.subr.mxu0 0.0
    %171 = vmatpush1.msra.mxu0 0.0
    %172 = vmatprep.subr.mxu0 0.0
    %173 = vmatpush1.msra.mxu0 0.0
    %174 = vmatprep.subr.mxu0 0.0
    %175 = vmatpush1.msra.mxu0 %v50
    %176 = vmatprep.subr.mxu0 0.0
    %177 = vmatpush1.msra.mxu0 %v49
    %178 = vmatprep.subr.mxu0 0.0
    %179 = vmatpush2.msra.mxu0 0.0
    %180 = vmatprep.subr.mxu0 0.0
    %181 = vmatpush2.msra.mxu0 0.0
    %182 = vmatprep.subr.mxu0 0.0
    %183 = vmatpush2.msra.mxu0 0.0
    %184 = vmatprep.subr.mxu0 0.0
    %185 = vmatpush2.msra.mxu0 0.0
    %186 = vmatprep.subr.mxu0 0.0
    %187 = vmatpush2.msra.mxu0 0.0
    %188 = vmatprep.subr.mxu0 0.0
    %189 = vmatpush2.msra.mxu0 0.0
    %190 = vmatprep.subr.mxu0 0.0
    %191 = vmatpush2.msra.mxu0 0.0
    %192 = vmatprep.subr.mxu0 0.0
    %193 = vmatpush2.msra.mxu0 0.0
    %194 = vmatprep.subr.mxu0 0.0
    %195 = vmatpush2.msra.mxu0 0.0
    %196 = vmatprep.subr.mxu0 0.0
    %197 = vmatpush2.msra.mxu0 0.0
    %198 = vmatprep.subr.mxu0 0.0
    %199 = vmatpush2.msra.mxu0 0.0
    %200 = vmatprep.subr.mxu0 0.0
    %201 = vmatpush2.msra.mxu0 0.0
    %202 = vmatprep.subr.mxu0 0.0
    %203 = vmatpush2.msra.mxu0 0.0
    %204 = vmatprep.subr.mxu0 0.0
    %205 = vmatpush2.msra.mxu0 0.0
    %206 = vmatprep.subr.mxu0 0.0
    %207 = vmatpush2.msra.mxu0 0.0
    %208 = vmatprep.subr.mxu0 0.0
    %209 = vmatpush2.msra.mxu0 0.0
    %210 = vmatprep.mubr.f32.mxu0 0.0
    %211 = vmatmul.mubr.f32.gmra.mxu0 %v141
    %v212 = vpop.f32.mrf.mxu0
    %v213 = vadd.f32 0.0, %v212
    %v214 = vpop.f32.mrf.mxu0
    %215 = vmatprep.mubr.f32.mxu0 0.0
    %216 = vmatmul.mubr.f32.gmra.mxu0 %v144
    %v217 = vpop.f32.mrf.mxu0
    %v218 = vadd.f32 0.0, %v217
    %v219 = vpop.f32.mrf.mxu0
    %220 = vdwg.mxu0
    %v221 = vld [vmem:[#allocation2] sm:$0xff]
    %v222 = vld [vmem:[#allocation2 + $0x8] sm:$0xff]
    %v223 = vld [vmem:[#allocation6] sm:$0xff]
    %v225 = vsel %vm52, %v213, 0
    %v228 = vsel %vm52, %v218, 0
    %230 = vmatprep.subr.mxu0 0.0
    %231 = vmatpush1.msra.mxu0 0.0
    %232 = vmatprep.subr.mxu0 0.0
    %233 = vmatpush1.msra.mxu0 0.0
    %234 = vmatprep.subr.mxu0 0.0
    %235 = vmatpush1.msra.mxu0 0.0
    %236 = vmatprep.subr.mxu0 0.0
    %237 = vmatpush1.msra.mxu0 0.0
    %238 = vmatprep.subr.mxu0 0.0
    %239 = vmatpush1.msra.mxu0 0.0
    %240 = vmatprep.subr.mxu0 0.0
    %241 = vmatpush1.msra.mxu0 0.0
    %242 = vmatprep.subr.mxu0 0.0
    %243 = vmatpush1.msra.mxu0 0.0
    %244 = vmatprep.subr.mxu0 0.0
    %245 = vmatpush1.msra.mxu0 0.0
    %246 = vmatprep.subr.mxu0 0.0
    %247 = vmatpush1.msra.mxu0 0.0
    %248 = vmatprep.subr.mxu0 0.0
    %249 = vmatpush1.msra.mxu0 0.0
    %250 = vmatprep.subr.mxu0 0.0
    %251 = vmatpush1.msra.mxu0 0.0
    %252 = vmatprep.subr.mxu0 0.0
    %253 = vmatpush1.msra.mxu0 0.0
    %254 = vmatprep.subr.mxu0 0.0
    %255 = vmatpush1.msra.mxu0 0.0
    %256 = vmatprep.subr.mxu0 0.0
    %257 = vmatpush1.msra.mxu0 0.0
    %258 = vmatprep.subr.mxu0 0.0
    %259 = vmatpush1.msra.mxu0 0.0
    %260 = vmatprep.subr.mxu0 0.0
    %261 = vmatpush1.msra.mxu0 %v223
    %262 = vmatprep.subr.mxu0 0.0
    %263 = vmatpush2.msra.mxu0 0.0
    %264 = vmatprep.subr.mxu0 0.0
    %265 = vmatpush2.msra.mxu0 0.0
    %266 = vmatprep.subr.mxu0 0.0
    %267 = vmatpush2.msra.mxu0 0.0
    %268 = vmatprep.subr.mxu0 0.0
    %269 = vmatpush2.msra.mxu0 0.0
    %270 = vmatprep.subr.mxu0 0.0
    %271 = vmatpush2.msra.mxu0 0.0
    %272 = vmatprep.subr.mxu0 0.0
    %273 = vmatpush2.msra.mxu0 0.0
    %274 = vmatprep.subr.mxu0 0.0
    %275 = vmatpush2.msra.mxu0 0.0
    %276 = vmatprep.subr.mxu0 0.0
    %277 = vmatpush2.msra.mxu0 0.0
    %278 = vmatprep.subr.mxu0 0.0
    %279 = vmatpush2.msra.mxu0 0.0
    %280 = vmatprep.subr.mxu0 0.0
    %281 = vmatpush2.msra.mxu0 0.0
    %282 = vmatprep.subr.mxu0 0.0
    %283 = vmatpush2.msra.mxu0 0.0
    %284 = vmatprep.subr.mxu0 0.0
    %285 = vmatpush2.msra.mxu0 0.0
    %286 = vmatprep.subr.mxu0 0.0
    %287 = vmatpush2.msra.mxu0 0.0
    %288 = vmatprep.subr.mxu0 0.0
    %289 = vmatpush2.msra.mxu0 0.0
    %290 = vmatprep.subr.mxu0 0.0
    %291 = vmatpush2.msra.mxu0 0.0
    %292 = vmatprep.subr.mxu0 0.0
    %293 = vmatpush2.msra.mxu0 0.0
    %294 = vmatprep.mubr.f32.mxu0 0.0
    %295 = vmatmul.mubr.f32.gmra.mxu0 %v225
    %v296 = vpop.f32.mrf.mxu0
    %v297 = vadd.f32 0.0, %v296
    %v298 = vpop.f32.mrf.mxu0
    %299 = vmatprep.mubr.f32.mxu0 0.0
    %300 = vmatmul.mubr.f32.gmra.mxu0 %v228
    %v301 = vpop.f32.mrf.mxu0
    %v302 = vadd.f32 0.0, %v301
    %v303 = vpop.f32.mrf.mxu0
    %304 = vdwg.mxu0
    %v305 = vadd.f32 %v221, %v297
    %v306 = vadd.f32 %v222, %v302
    %307 = vst.msk [vmem:[#allocation2] sm:$0xff] %vm134, %v305
    %308 = vst.msk [vmem:[#allocation2 + $0x8] sm:$0xff] %vm134, %v306
    %v309 = vadd.f32 %v137, %v137
    %v310 = vadd.f32 %v138, %v138
    %v312 = vsel %vm139, %v309, 0
    %v315 = vsel %vm139, %v310, 0
    %317 = vmatprep.subr.mxu0 0.0
    %318 = vmatpush1.msra.mxu0 0.0
    %319 = vmatprep.subr.mxu0 0.0
    %320 = vmatpush1.msra.mxu0 0.0
    %321 = vmatprep.subr.mxu0 0.0
    %322 = vmatpush1.msra.mxu0 0.0
    %323 = vmatprep.subr.mxu0 0.0
    %324 = vmatpush1.msra.mxu0 0.0
    %325 = vmatprep.subr.mxu0 0.0
    %326 = vmatpush1.msra.mxu0 0.0
    %327 = vmatprep.subr.mxu0 0.0
    %328 = vmatpush1.msra.mxu0 0.0
    %329 = vmatprep.subr.mxu0 0.0
    %330 = vmatpush1.msra.mxu0 0.0
    %331 = vmatprep.subr.mxu0 0.0
    %332 = vmatpush1.msra.mxu0 0.0
    %333 = vmatprep.subr.mxu0 0.0
    %334 = vmatpush1.msra.mxu0 0.0
    %335 = vmatprep.subr.mxu0 0.0
    %336 = vmatpush1.msra.mxu0 0.0
    %337 = vmatprep.subr.mxu0 0.0
    %338 = vmatpush1.msra.mxu0 0.0
    %339 = vmatprep.subr.mxu0 0.0
    %340 = vmatpush1.msra.mxu0 0.0
    %341 = vmatprep.subr.mxu0 0.0
    %342 = vmatpush1.msra.mxu0 0.0
    %343 = vmatprep.subr.mxu0 0.0
    %344 = vmatpush1.msra.mxu0 0.0
    %345 = vmatprep.subr.mxu0 0.0
    %346 = vmatpush1.msra.mxu0 %v218
    %347 = vmatprep.subr.mxu0 0.0
    %348 = vmatpush1.msra.mxu0 %v213
    %349 = vmatprep.subr.mxu0 0.0
    %350 = vmatpush2.msra.mxu0 0.0
    %351 = vmatprep.subr.mxu0 0.0
    %352 = vmatpush2.msra.mxu0 0.0
    %353 = vmatprep.subr.mxu0 0.0
    %354 = vmatpush2.msra.mxu0 0.0
    %355 = vmatprep.subr.mxu0 0.0
    %356 = vmatpush2.msra.mxu0 0.0
    %357 = vmatprep.subr.mxu0 0.0
    %358 = vmatpush2.msra.mxu0 0.0
    %359 = vmatprep.subr.mxu0 0.0
    %360 = vmatpush2.msra.mxu0 0.0
    %361 = vmatprep.subr.mxu0 0.0
    %362 = vmatpush2.msra.mxu0 0.0
    %363 = vmatprep.subr.mxu0 0.0
    %364 = vmatpush2.msra.mxu0 0.0
    %365 = vmatprep.subr.mxu0 0.0
    %366 = vmatpush2.msra.mxu0 0.0
    %367 = vmatprep.subr.mxu0 0.0
    %368 = vmatpush2.msra.mxu0 0.0
    %369 = vmatprep.subr.mxu0 0.0
    %370 = vmatpush2.msra.mxu0 0.0
    %371 = vmatprep.subr.mxu0 0.0
    %372 = vmatpush2.msra.mxu0 0.0
    %373 = vmatprep.subr.mxu0 0.0
    %374 = vmatpush2.msra.mxu0 0.0
    %375 = vmatprep.subr.mxu0 0.0
    %376 = vmatpush2.msra.mxu0 0.0
    %377 = vmatprep.subr.mxu0 0.0
    %378 = vmatpush2.msra.mxu0 0.0
    %379 = vmatprep.subr.mxu0 0.0
    %380 = vmatpush2.msra.mxu0 0.0
    %381 = vmatprep.mubr.f32.mxu0 0.0
    %382 = vmatmul.mubr.f32.gmra.mxu0 %v312
    %v383 = vpop.f32.mrf.mxu0
    %v384 = vadd.f32 0.0, %v383
    %v385 = vpop.f32.mrf.mxu0
    %386 = vmatprep.mubr.f32.mxu0 0.0
    %387 = vmatmul.mubr.f32.gmra.mxu0 %v315
    %v388 = vpop.f32.mrf.mxu0
    %v389 = vadd.f32 0.0, %v388
    %v390 = vpop.f32.mrf.mxu0
    %391 = vdwg.mxu0
    %v392 = vsub.f32 %v384, %v49
    %v393 = vsub.f32 %v389, %v50
    %v394 = vld [vmem:[#allocation2] sm:$0xff]
    %v395 = vld [vmem:[#allocation2 + $0x8] sm:$0xff]
    %s396 = scalar_lea.vmem [#allocation6], 8
    %v397 = vld [vmem:[%s396] sm:$0xff]
    %v399 = vsel %vm52, %v392, 0
    %v402 = vsel %vm52, %v393, 0
    %404 = vmatprep.subr.mxu0 0.0
    %405 = vmatpush1.msra.mxu0 0.0
    %406 = vmatprep.subr.mxu0 0.0
    %407 = vmatpush1.msra.mxu0 0.0
    %408 = vmatprep.subr.mxu0 0.0
    %409 = vmatpush1.msra.mxu0 0.0
    %410 = vmatprep.subr.mxu0 0.0
    %411 = vmatpush1.msra.mxu0 0.0
    %412 = vmatprep.subr.mxu0 0.0
    %413 = vmatpush1.msra.mxu0 0.0
    %414 = vmatprep.subr.mxu0 0.0
    %415 = vmatpush1.msra.mxu0 0.0
    %416 = vmatprep.subr.mxu0 0.0
    %417 = vmatpush1.msra.mxu0 0.0
    %418 = vmatprep.subr.mxu0 0.0
    %419 = vmatpush1.msra.mxu0 0.0
    %420 = vmatprep.subr.mxu0 0.0
    %421 = vmatpush1.msra.mxu0 0.0
    %422 = vmatprep.subr.mxu0 0.0
    %423 = vmatpush1.msra.mxu0 0.0
    %424 = vmatprep.subr.mxu0 0.0
    %425 = vmatpush1.msra.mxu0 0.0
    %426 = vmatprep.subr.mxu0 0.0
    %427 = vmatpush1.msra.mxu0 0.0
    %428 = vmatprep.subr.mxu0 0.0
    %429 = vmatpush1.msra.mxu0 0.0
    %430 = vmatprep.subr.mxu0 0.0
    %431 = vmatpush1.msra.mxu0 0.0
    %432 = vmatprep.subr.mxu0 0.0
    %433 = vmatpush1.msra.mxu0 0.0
    %434 = vmatprep.subr.mxu0 0.0
    %435 = vmatpush1.msra.mxu0 %v397
    %436 = vmatprep.subr.mxu0 0.0
    %437 = vmatpush2.msra.mxu0 0.0
    %438 = vmatprep.subr.mxu0 0.0
    %439 = vmatpush2.msra.mxu0 0.0
    %440 = vmatprep.subr.mxu0 0.0
    %441 = vmatpush2.msra.mxu0 0.0
    %442 = vmatprep.subr.mxu0 0.0
    %443 = vmatpush2.msra.mxu0 0.0
    %444 = vmatprep.subr.mxu0 0.0
    %445 = vmatpush2.msra.mxu0 0.0
    %446 = vmatprep.subr.mxu0 0.0
    %447 = vmatpush2.msra.mxu0 0.0
    %448 = vmatprep.subr.mxu0 0.0
    %449 = vmatpush2.msra.mxu0 0.0
    %450 = vmatprep.subr.mxu0 0.0
    %451 = vmatpush2.msra.mxu0 0.0
    %452 = vmatprep.subr.mxu0 0.0
    %453 = vmatpush2.msra.mxu0 0.0
    %454 = vmatprep.subr.mxu0 0.0
    %455 = vmatpush2.msra.mxu0 0.0
    %456 = vmatprep.subr.mxu0 0.0
    %457 = vmatpush2.msra.mxu0 0.0
    %458 = vmatprep.subr.mxu0 0.0
    %459 = vmatpush2.msra.mxu0 0.0
    %460 = vmatprep.subr.mxu0 0.0
    %461 = vmatpush2.msra.mxu0 0.0
    %462 = vmatprep.subr.mxu0 0.0
    %463 = vmatpush2.msra.mxu0 0.0
    %464 = vmatprep.subr.mxu0 0.0
    %465 = vmatpush2.msra.mxu0 0.0
    %466 = vmatprep.subr.mxu0 0.0
    %467 = vmatpush2.msra.mxu0 0.0
    %468 = vmatprep.mubr.f32.mxu0 0.0
    %469 = vmatmul.mubr.f32.gmra.mxu0 %v399
    %v470 = vpop.f32.mrf.mxu0
    %v471 = vadd.f32 0.0, %v470
    %v472 = vpop.f32.mrf.mxu0
    %473 = vmatprep.mubr.f32.mxu0 0.0
    %474 = vmatmul.mubr.f32.gmra.mxu0 %v402
    %v475 = vpop.f32.mrf.mxu0
    %v476 = vadd.f32 0.0, %v475
    %v477 = vpop.f32.mrf.mxu0
    %478 = vdwg.mxu0
    %v479 = vadd.f32 %v394, %v471
    %v480 = vadd.f32 %v395, %v476
    %481 = vst.msk [vmem:[#allocation2] sm:$0xff] %vm134, %v479
    %482 = vst.msk [vmem:[#allocation2 + $0x8] sm:$0xff] %vm134, %v480
    %s483 = scalar_lea.vmem [#allocation3], 16
    %v484 = vld [vmem:[%s483] sm:$0xff]
    %v485 = vld [vmem:[%s483 + $0x8] sm:$0xff]
    %v487 = vsel %vm139, %v484, 0
    %v490 = vsel %vm139, %v485, 0
    %492 = vmatprep.subr.mxu0 0.0
    %493 = vmatpush1.msra.mxu0 0.0
    %494 = vmatprep.subr.mxu0 0.0
    %495 = vmatpush1.msra.mxu0 0.0
    %496 = vmatprep.subr.mxu0 0.0
    %497 = vmatpush1.msra.mxu0 0.0
    %498 = vmatprep.subr.mxu0 0.0
    %499 = vmatpush1.msra.mxu0 0.0
    %500 = vmatprep.subr.mxu0 0.0
    %501 = vmatpush1.msra.mxu0 0.0
    %502 = vmatprep.subr.mxu0 0.0
    %503 = vmatpush1.msra.mxu0 0.0
    %504 = vmatprep.subr.mxu0 0.0
    %505 = vmatpush1.msra.mxu0 0.0
    %506 = vmatprep.subr.mxu0 0.0
    %507 = vmatpush1.msra.mxu0 0.0
    %508 = vmatprep.subr.mxu0 0.0
    %509 = vmatpush1.msra.mxu0 0.0
    %510 = vmatprep.subr.mxu0 0.0
    %511 = vmatpush1.msra.mxu0 0.0
    %512 = vmatprep.subr.mxu0 0.0
    %513 = vmatpush1.msra.mxu0 0.0
    %514 = vmatprep.subr.mxu0 0.0
    %515 = vmatpush1.msra.mxu0 0.0
    %516 = vmatprep.subr.mxu0 0.0
    %517 = vmatpush1.msra.mxu0 0.0
    %518 = vmatprep.subr.mxu0 0.0
    %519 = vmatpush1.msra.mxu0 0.0
    %520 = vmatprep.subr.mxu0 0.0
    %521 = vmatpush1.msra.mxu0 %v50
    %522 = vmatprep.subr.mxu0 0.0
    %523 = vmatpush1.msra.mxu0 %v49
    %524 = vmatprep.subr.mxu0 0.0
    %525 = vmatpush2.msra.mxu0 0.0
    %526 = vmatprep.subr.mxu0 0.0
    %527 = vmatpush2.msra.mxu0 0.0
    %528 = vmatprep.subr.mxu0 0.0
    %529 = vmatpush2.msra.mxu0 0.0
    %530 = vmatprep.subr.mxu0 0.0
    %531 = vmatpush2.msra.mxu0 0.0
    %532 = vmatprep.subr.mxu0 0.0
    %533 = vmatpush2.msra.mxu0 0.0
    %534 = vmatprep.subr.mxu0 0.0
    %535 = vmatpush2.msra.mxu0 0.0
    %536 = vmatprep.subr.mxu0 0.0
    %537 = vmatpush2.msra.mxu0 0.0
    %538 = vmatprep.subr.mxu0 0.0
    %539 = vmatpush2.msra.mxu0 0.0
    %540 = vmatprep.subr.mxu0 0.0
    %541 = vmatpush2.msra.mxu0 0.0
    %542 = vmatprep.subr.mxu0 0.0
    %543 = vmatpush2.msra.mxu0 0.0
    %544 = vmatprep.subr.mxu0 0.0
    %545 = vmatpush2.msra.mxu0 0.0
    %546 = vmatprep.subr.mxu0 0.0
    %547 = vmatpush2.msra.mxu0 0.0
    %548 = vmatprep.subr.mxu0 0.0
    %549 = vmatpush2.msra.mxu0 0.0
    %550 = vmatprep.subr.mxu0 0.0
    %551 = vmatpush2.msra.mxu0 0.0
    %552 = vmatprep.subr.mxu0 0.0
    %553 = vmatpush2.msra.mxu0 0.0
    %554 = vmatprep.subr.mxu0 0.0
    %555 = vmatpush2.msra.mxu0 0.0
    %556 = vmatprep.mubr.f32.mxu0 0.0
    %557 = vmatmul.mubr.f32.gmra.mxu0 %v487
    %v558 = vpop.f32.mrf.mxu0
    %v559 = vadd.f32 0.0, %v558
    %v560 = vpop.f32.mrf.mxu0
    %561 = vmatprep.mubr.f32.mxu0 0.0
    %562 = vmatmul.mubr.f32.gmra.mxu0 %v490
    %v563 = vpop.f32.mrf.mxu0
    %v564 = vadd.f32 0.0, %v563
    %v565 = vpop.f32.mrf.mxu0
    %566 = vdwg.mxu0
    %v567 = vld [vmem:[#allocation2] sm:$0xff]
    %v568 = vld [vmem:[#allocation2 + $0x8] sm:$0xff]
    %s569 = scalar_lea.vmem [#allocation6], 16
    %v570 = vld [vmem:[%s569] sm:$0xff]
    %v572 = vsel %vm52, %v559, 0
    %v575 = vsel %vm52, %v564, 0
    %577 = vmatprep.subr.mxu0 0.0
    %578 = vmatpush1.msra.mxu0 0.0
    %579 = vmatprep.subr.mxu0 0.0
    %580 = vmatpush1.msra.mxu0 0.0
    %581 = vmatprep.subr.mxu0 0.0
    %582 = vmatpush1.msra.mxu0 0.0
    %583 = vmatprep.subr.mxu0 0.0
    %584 = vmatpush1.msra.mxu0 0.0
    %585 = vmatprep.subr.mxu0 0.0
    %586 = vmatpush1.msra.mxu0 0.0
    %587 = vmatprep.subr.mxu0 0.0
    %588 = vmatpush1.msra.mxu0 0.0
    %589 = vmatprep.subr.mxu0 0.0
    %590 = vmatpush1.msra.mxu0 0.0
    %591 = vmatprep.subr.mxu0 0.0
    %592 = vmatpush1.msra.mxu0 0.0
    %593 = vmatprep.subr.mxu0 0.0
    %594 = vmatpush1.msra.mxu0 0.0
    %595 = vmatprep.subr.mxu0 0.0
    %596 = vmatpush1.msra.mxu0 0.0
    %597 = vmatprep.subr.mxu0 0.0
    %598 = vmatpush1.msra.mxu0 0.0
    %599 = vmatprep.subr.mxu0 0.0
    %600 = vmatpush1.msra.mxu0 0.0
    %601 = vmatprep.subr.mxu0 0.0
    %602 = vmatpush1.msra.mxu0 0.0
    %603 = vmatprep.subr.mxu0 0.0
    %604 = vmatpush1.msra.mxu0 0.0
    %605 = vmatprep.subr.mxu0 0.0
    %606 = vmatpush1.msra.mxu0 0.0
    %607 = vmatprep.subr.mxu0 0.0
    %608 = vmatpush1.msra.mxu0 %v570
    %609 = vmatprep.subr.mxu0 0.0
    %610 = vmatpush2.msra.mxu0 0.0
    %611 = vmatprep.subr.mxu0 0.0
    %612 = vmatpush2.msra.mxu0 0.0
    %613 = vmatprep.subr.mxu0 0.0
    %614 = vmatpush2.msra.mxu0 0.0
    %615 = vmatprep.subr.mxu0 0.0
    %616 = vmatpush2.msra.mxu0 0.0
    %617 = vmatprep.subr.mxu0 0.0
    %618 = vmatpush2.msra.mxu0 0.0
    %619 = vmatprep.subr.mxu0 0.0
    %620 = vmatpush2.msra.mxu0 0.0
    %621 = vmatprep.subr.mxu0 0.0
    %622 = vmatpush2.msra.mxu0 0.0
    %623 = vmatprep.subr.mxu0 0.0
    %624 = vmatpush2.msra.mxu0 0.0
    %625 = vmatprep.subr.mxu0 0.0
    %626 = vmatpush2.msra.mxu0 0.0
    %627 = vmatprep.subr.mxu0 0.0
    %628 = vmatpush2.msra.mxu0 0.0
    %629 = vmatprep.subr.mxu0 0.0
    %630 = vmatpush2.msra.mxu0 0.0
    %631 = vmatprep.subr.mxu0 0.0
    %632 = vmatpush2.msra.mxu0 0.0
    %633 = vmatprep.subr.mxu0 0.0
    %634 = vmatpush2.msra.mxu0 0.0
    %635 = vmatprep.subr.mxu0 0.0
    %636 = vmatpush2.msra.mxu0 0.0
    %637 = vmatprep.subr.mxu0 0.0
    %638 = vmatpush2.msra.mxu0 0.0
    %639 = vmatprep.subr.mxu0 0.0
    %640 = vmatpush2.msra.mxu0 0.0
    %641 = vmatprep.mubr.f32.mxu0 0.0
    %642 = vmatmul.mubr.f32.gmra.mxu0 %v572
    %v643 = vpop.f32.mrf.mxu0
    %v644 = vadd.f32 0.0, %v643
    %v645 = vpop.f32.mrf.mxu0
    %646 = vmatprep.mubr.f32.mxu0 0.0
    %647 = vmatmul.mubr.f32.gmra.mxu0 %v575
    %v648 = vpop.f32.mrf.mxu0
    %v649 = vadd.f32 0.0, %v648
    %v650 = vpop.f32.mrf.mxu0
    %651 = vdwg.mxu0
    %v652 = vadd.f32 %v567, %v644
    %v653 = vadd.f32 %v568, %v649
    %654 = vst.msk [vmem:[#allocation2] sm:$0xff] %vm134, %v652
    %655 = vst.msk [vmem:[#allocation2 + $0x8] sm:$0xff] %vm134, %v653
    %v656 = vadd.f32 %v484, %v484
    %v657 = vadd.f32 %v485, %v485
    %v659 = vsel %vm139, %v656, 0
    %v662 = vsel %vm139, %v657, 0
    %664 = vmatprep.subr.mxu0 0.0
    %665 = vmatpush1.msra.mxu0 0.0
    %666 = vmatprep.subr.mxu0 0.0
    %667 = vmatpush1.msra.mxu0 0.0
    %668 = vmatprep.subr.mxu0 0.0
    %669 = vmatpush1.msra.mxu0 0.0
    %670 = vmatprep.subr.mxu0 0.0
    %671 = vmatpush1.msra.mxu0 0.0
    %672 = vmatprep.subr.mxu0 0.0
    %673 = vmatpush1.msra.mxu0 0.0
    %674 = vmatprep.subr.mxu0 0.0
    %675 = vmatpush1.msra.mxu0 0.0
    %676 = vmatprep.subr.mxu0 0.0
    %677 = vmatpush1.msra.mxu0 0.0
    %678 = vmatprep.subr.mxu0 0.0
    %679 = vmatpush1.msra.mxu0 0.0
    %680 = vmatprep.subr.mxu0 0.0
    %681 = vmatpush1.msra.mxu0 0.0
    %682 = vmatprep.subr.mxu0 0.0
    %683 = vmatpush1.msra.mxu0 0.0
    %684 = vmatprep.subr.mxu0 0.0
    %685 = vmatpush1.msra.mxu0 0.0
    %686 = vmatprep.subr.mxu0 0.0
    %687 = vmatpush1.msra.mxu0 0.0
    %688 = vmatprep.subr.mxu0 0.0
    %689 = vmatpush1.msra.mxu0 0.0
    %690 = vmatprep.subr.mxu0 0.0
    %691 = vmatpush1.msra.mxu0 0.0
    %692 = vmatprep.subr.mxu0 0.0
    %693 = vmatpush1.msra.mxu0 %v564
    %694 = vmatprep.subr.mxu0 0.0
    %695 = vmatpush1.msra.mxu0 %v559
    %696 = vmatprep.subr.mxu0 0.0
    %697 = vmatpush2.msra.mxu0 0.0
    %698 = vmatprep.subr.mxu0 0.0
    %699 = vmatpush2.msra.mxu0 0.0
    %700 = vmatprep.subr.mxu0 0.0
    %701 = vmatpush2.msra.mxu0 0.0
    %702 = vmatprep.subr.mxu0 0.0
    %703 = vmatpush2.msra.mxu0 0.0
    %704 = vmatprep.subr.mxu0 0.0
    %705 = vmatpush2.msra.mxu0 0.0
    %706 = vmatprep.subr.mxu0 0.0
    %707 = vmatpush2.msra.mxu0 0.0
    %708 = vmatprep.subr.mxu0 0.0
    %709 = vmatpush2.msra.mxu0 0.0
    %710 = vmatprep.subr.mxu0 0.0
    %711 = vmatpush2.msra.mxu0 0.0
    %712 = vmatprep.subr.mxu0 0.0
    %713 = vmatpush2.msra.mxu0 0.0
    %714 = vmatprep.subr.mxu0 0.0
    %715 = vmatpush2.msra.mxu0 0.0
    %716 = vmatprep.subr.mxu0 0.0
    %717 = vmatpush2.msra.mxu0 0.0
    %718 = vmatprep.subr.mxu0 0.0
    %719 = vmatpush2.msra.mxu0 0.0
    %720 = vmatprep.subr.mxu0 0.0
    %721 = vmatpush2.msra.mxu0 0.0
    %722 = vmatprep.subr.mxu0 0.0
    %723 = vmatpush2.msra.mxu0 0.0
    %724 = vmatprep.subr.mxu0 0.0
    %725 = vmatpush2.msra.mxu0 0.0
    %726 = vmatprep.subr.mxu0 0.0
    %727 = vmatpush2.msra.mxu0 0.0
    %728 = vmatprep.mubr.f32.mxu0 0.0
    %729 = vmatmul.mubr.f32.gmra.mxu0 %v659
    %v730 = vpop.f32.mrf.mxu0
    %v731 = vadd.f32 0.0, %v730
    %v732 = vpop.f32.mrf.mxu0
    %733 = vmatprep.mubr.f32.mxu0 0.0
    %734 = vmatmul.mubr.f32.gmra.mxu0 %v662
    %v735 = vpop.f32.mrf.mxu0
    %v736 = vadd.f32 0.0, %v735
    %v737 = vpop.f32.mrf.mxu0
    %738 = vdwg.mxu0
    %v739 = vsub.f32 %v731, %v49
    %v740 = vsub.f32 %v736, %v50
    %v741 = vld [vmem:[#allocation2] sm:$0xff]
    %v742 = vld [vmem:[#allocation2 + $0x8] sm:$0xff]
    %s743 = scalar_lea.vmem [#allocation6], 24
    %v744 = vld [vmem:[%s743] sm:$0xff]
    %v746 = vsel %vm52, %v739, 0
    %v749 = vsel %vm52, %v740, 0
    %751 = vmatprep.subr.mxu0 0.0
    %752 = vmatpush1.msra.mxu0 0.0
    %753 = vmatprep.subr.mxu0 0.0
    %754 = vmatpush1.msra.mxu0 0.0
    %755 = vmatprep.subr.mxu0 0.0
    %756 = vmatpush1.msra.mxu0 0.0
    %757 = vmatprep.subr.mxu0 0.0
    %758 = vmatpush1.msra.mxu0 0.0
    %759 = vmatprep.subr.mxu0 0.0
    %760 = vmatpush1.msra.mxu0 0.0
    %761 = vmatprep.subr.mxu0 0.0
    %762 = vmatpush1.msra.mxu0 0.0
    %763 = vmatprep.subr.mxu0 0.0
    %764 = vmatpush1.msra.mxu0 0.0
    %765 = vmatprep.subr.mxu0 0.0
    %766 = vmatpush1.msra.mxu0 0.0
    %767 = vmatprep.subr.mxu0 0.0
    %768 = vmatpush1.msra.mxu0 0.0
    %769 = vmatprep.subr.mxu0 0.0
    %770 = vmatpush1.msra.mxu0 0.0
    %771 = vmatprep.subr.mxu0 0.0
    %772 = vmatpush1.msra.mxu0 0.0
    %773 = vmatprep.subr.mxu0 0.0
    %774 = vmatpush1.msra.mxu0 0.0
    %775 = vmatprep.subr.mxu0 0.0
    %776 = vmatpush1.msra.mxu0 0.0
    %777 = vmatprep.subr.mxu0 0.0
    %778 = vmatpush1.msra.mxu0 0.0
    %779 = vmatprep.subr.mxu0 0.0
    %780 = vmatpush1.msra.mxu0 0.0
    %781 = vmatprep.subr.mxu0 0.0
    %782 = vmatpush1.msra.mxu0 %v744
    %783 = vmatprep.subr.mxu0 0.0
    %784 = vmatpush2.msra.mxu0 0.0
    %785 = vmatprep.subr.mxu0 0.0
    %786 = vmatpush2.msra.mxu0 0.0
    %787 = vmatprep.subr.mxu0 0.0
    %788 = vmatpush2.msra.mxu0 0.0
    %789 = vmatprep.subr.mxu0 0.0
    %790 = vmatpush2.msra.mxu0 0.0
    %791 = vmatprep.subr.mxu0 0.0
    %792 = vmatpush2.msra.mxu0 0.0
    %793 = vmatprep.subr.mxu0 0.0
    %794 = vmatpush2.msra.mxu0 0.0
    %795 = vmatprep.subr.mxu0 0.0
    %796 = vmatpush2.msra.mxu0 0.0
    %797 = vmatprep.subr.mxu0 0.0
    %798 = vmatpush2.msra.mxu0 0.0
    %799 = vmatprep.subr.mxu0 0.0
    %800 = vmatpush2.msra.mxu0 0.0
    %801 = vmatprep.subr.mxu0 0.0
    %802 = vmatpush2.msra.mxu0 0.0
    %803 = vmatprep.subr.mxu0 0.0
    %804 = vmatpush2.msra.mxu0 0.0
    %805 = vmatprep.subr.mxu0 0.0
    %806 = vmatpush2.msra.mxu0 0.0
    %807 = vmatprep.subr.mxu0 0.0
    %808 = vmatpush2.msra.mxu0 0.0
    %809 = vmatprep.subr.mxu0 0.0
    %810 = vmatpush2.msra.mxu0 0.0
    %811 = vmatprep.subr.mxu0 0.0
    %812 = vmatpush2.msra.mxu0 0.0
    %813 = vmatprep.subr.mxu0 0.0
    %814 = vmatpush2.msra.mxu0 0.0
    %815 = vmatprep.mubr.f32.mxu0 0.0
    %816 = vmatmul.mubr.f32.gmra.mxu0 %v746
    %v817 = vpop.f32.mrf.mxu0
    %v818 = vadd.f32 0.0, %v817
    %v819 = vpop.f32.mrf.mxu0
    %820 = vmatprep.mubr.f32.mxu0 0.0
    %821 = vmatmul.mubr.f32.gmra.mxu0 %v749
    %v822 = vpop.f32.mrf.mxu0
    %v823 = vadd.f32 0.0, %v822
    %v824 = vpop.f32.mrf.mxu0
    %825 = vdwg.mxu0
    %v826 = vadd.f32 %v741, %v818
    %v827 = vadd.f32 %v742, %v823
    %828 = vst.msk [vmem:[#allocation2] sm:$0xff] %vm134, %v826
    %829 = vst.msk [vmem:[#allocation2 + $0x8] sm:$0xff] %vm134, %v827
    %v830 = vld [vmem:[#allocation2] sm:$0xff]
    %v831 = vld [vmem:[#allocation2 + $0x8] sm:$0xff]
    %v832 = vld [vmem:[%s4] sm:$0x1]
    %v834 = vlaneseq
    %v835 = vshrl.u32 %v834, 7
    %v836 = vsub.s32 0, %v835
    %v837 = vrot.slane %v832, %v836
    %v839 = vadd.f32 %v830, %v837
    %v840 = vadd.f32 %v831, %v837
    %841 = vst.msk [vmem:[#allocation8] sm:$0xff] %vm134, %v839
    %842 = vst.msk [vmem:[#allocation8 + $0x8] sm:$0xff] %vm134, %v840
    // Predicated region
    $region30: #{tpu_custom_call.1} parent=1 // pred_check
      _
    $region31: #{tpu_custom_call.1} parent=1 // pred_check_branch
      %844 = sbr.rel (0) target = $region33
    $region32: #{tpu_custom_call.1} parent=1 // pred_region
      %s846 = ssub.s32 256, 256
      %847 = vsyncadd [#allocation5], %s846
      %s848 = sshll.u32 [#allocation8], 4
      %s849 = int_to_ptr.vmem [resolvable:$true] %s848
      %854 = dma.vmem_to_hbm [thread:$0]  %s849, 256, %s5, [#allocation5], 128, 128, 8
    $region33: #{tpu_custom_call.1} parent=1 // pred_fallthru
      _
    // Predicated region
    $region34: #{tpu_custom_call.1} parent=1 // pred_check
      _
    $region35: #{tpu_custom_call.1} parent=1 // pred_check_branch
      %856 = sbr.rel (0) target = $region37
    $region36: #{tpu_custom_call.1} parent=1 // pred_region
      %857 = dma.done [#allocation5], 256
    $region37: #{tpu_custom_call.1} parent=1 // pred_fallthru
      _
    %858 = vsyncpa [#allocation4], 1
    %859 = vsyncpa [#allocation7], 1
    %860 = vsyncpa [#allocation5], 1

</llo_original>
